<compile_context>
chip_gen: v6e
topology: v6e:2x2x1
jax: 0.10.0
libtpu: 0.0.40
codegen_flags: <defaults>
</compile_context>

<pallas_src>
import numpy as np

import jax
import jax.numpy as jnp
from jax import lax
from jax.experimental import pallas as pl
from jax.experimental.pallas import tpu as pltpu

SCALER = 20.0
BG_PROT_MODE = 'gridconv'
BG_THRESH = 0.95
FG_PROT_MODE = 'gridconv+'
FG_THRESH = 0.95

PSLOTS = 128           # prototype slots padded to full lane width; last slot = global fg proto


def _vmem_limit_bytes():
    # generation-aware: leave headroom on v7x's 64 MiB VMEM, keep <=64 MiB elsewhere
    try:
        cap = int(pltpu.get_tpu_info().vmem_capacity_bytes)
    except Exception:
        cap = 64 * 1024 * 1024
    return min((cap * 3) // 4, 64 * 1024 * 1024)


VMEM_LIMIT = _vmem_limit_bytes()


# ----------------------------------------------------------------------------
# tiling helpers
# ----------------------------------------------------------------------------
def _round_up(n, m):
    return ((n + m - 1) // m) * m


def _choose_row_tile(n, pref=1024):
    """Sublane-axis tile for the encoder: divides n, multiple of 8 (or whole array)."""
    if n <= pref:
        return n
    for t in range(pref - (pref % 8), 7, -8):
        if n % t == 0:
            return t
    return n


def _choose_support_tile(hw):
    """Lane-axis tile of the proto-stage reduction grid (multiple of 128 or whole)."""
    if hw % 128 != 0 or hw <= 2048:
        return hw
    for m in range(16, 0, -1):
        t = m * 128
        if hw % t == 0:
            return t
    return hw


def _choose_query_tile(hw_pad):
    """Query lane tile: multiple of 128, prefer >=4 grid steps (2 per TC on v7x)."""
    for t in range(1024, 127, -128):
        if hw_pad % t == 0 and hw_pad // t >= 4:
            return t
    for t in range(1024, 127, -128):
        if hw_pad % t == 0:
            return t
    return 128


# ----------------------------------------------------------------------------
# Pallas kernel 1: synthetic encoder (patch-embed matmul + bias + ReLU), tiled
#   bf16 operands + bf16 HBM output; bias/ReLU in f32.
# ----------------------------------------------------------------------------
def _patch_embed_kernel(x_ref, w_ref, b_ref, o_ref):
    y = jnp.dot(x_ref[...], w_ref[...], preferred_element_type=jnp.float32)
    y = jnp.maximum(y + b_ref[...], 0.0)
    o_ref[...] = y.astype(o_ref.dtype)


def patch_embed(x_patches, w, b):
    n_p, k_in = x_patches.shape
    c = w.shape[1]
    tm = _choose_row_tile(n_p, pref=1024)
    return pl.pallas_call(
        _patch_embed_kernel,
        grid=(n_p // tm,),
        out_shape=jax.ShapeDtypeStruct((n_p, c), jnp.bfloat16),
        in_specs=[pl.BlockSpec((tm, k_in), lambda i: (i, 0)),
                  pl.BlockSpec((k_in, c), lambda i: (0, 0)),
                  pl.BlockSpec((1, c), lambda i: (0, 0))],
        out_specs=pl.BlockSpec((tm, c), lambda i: (i, 0)),
        compiler_params=pltpu.CompilerParams(
            dimension_semantics=("parallel",),
            vmem_limit_bytes=VMEM_LIMIT),
    )(x_patches, w, b)


# ----------------------------------------------------------------------------
# Pallas kernel 2a: prototype stage (HW-tiled reduction grid)
#   support (HW, C) bf16 + per-pixel cell ids + fg masked-average weights
#     -> (128, C) bf16 prototypes: rows 0..ncells-1 grid avg-pool protos,
#        row 127 global fg proto; all safe_norm'd with SCALER folded in.
# ----------------------------------------------------------------------------
def _make_proto_kernel(pslots, thw, inv_kk, scaler):
    def kernel(cell_ref, fgw_ref, sup_ref, out_ref, acc_ref):
        t = pl.program_id(0)

        @pl.when(t == 0)
        def _():
            acc_ref[...] = jnp.zeros_like(acc_ref)

        # Pool-weight chunk built in-kernel from the per-pixel cell id (no dense
        # (128, HW) f32 pool matrix in HBM).  Last slot carries the fg
        # masked-average weights so grid protos + global fg proto come from ONE
        # MXU matmul.
        row = lax.broadcasted_iota(jnp.int32, (pslots, thw), 0)
        w = jnp.where(row == cell_ref[...], jnp.float32(inv_kk), jnp.float32(0.0))
        w = jnp.where(row == pslots - 1, fgw_ref[...], w)
        acc_ref[...] += jnp.dot(w.astype(jnp.bfloat16), sup_ref[...],
                                preferred_element_type=jnp.float32)

        @pl.when(t == pl.num_programs(0) - 1)
        def _():
            p = acc_ref[...]
            n2 = jnp.sum(p * p, axis=1, keepdims=True)
            # safe_norm (eps 1e-4) with SCALER folded in once (saves per-tile
            # (P, T) multiplies in the query stage)
            out_ref[...] = (p * (lax.rsqrt(jnp.maximum(n2, 1e-8)) * scaler)
                            ).astype(out_ref.dtype)
    return kernel


def _proto_stage(cell_ids, fgw, sup_bf, k):
    hw, cpad = sup_bf.shape
    thw = _choose_support_tile(hw)
    kernel = _make_proto_kernel(PSLOTS, thw, 1.0 / float(k * k), SCALER)
    return pl.pallas_call(
        kernel,
        grid=(hw // thw,),
        out_shape=jax.ShapeDtypeStruct((PSLOTS, cpad), jnp.bfloat16),
        in_specs=[pl.BlockSpec((1, thw), lambda t: (0, t)),
                  pl.BlockSpec((1, thw), lambda t: (0, t)),
                  pl.BlockSpec((thw, cpad), lambda t: (t, 0))],
        out_specs=pl.BlockSpec((PSLOTS, cpad), lambda t: (0, 0)),
        scratch_shapes=[pltpu.VMEM((PSLOTS, cpad), jnp.float32)],
        compiler_params=pltpu.CompilerParams(
            dimension_semantics=("arbitrary",),
            vmem_limit_bytes=VMEM_LIMIT),
    )(cell_ids, fgw, sup_bf)


# ----------------------------------------------------------------------------
# Pallas kernel 2b: query stage (single matmul + fused bg/fg softmax + assignment)
# ----------------------------------------------------------------------------
def _make_query_kernel(pslots):
    def kernel(flag_ref, qryT_ref, proto_ref, stats_ref, out_ref):
        q = qryT_ref[...].astype(jnp.float32)                      # (C, T)
        qn2 = jnp.sum(q * q, axis=0, keepdims=True)                # (1, T)
        q_bf = (q * lax.rsqrt(jnp.maximum(qn2, 1e-8))).astype(jnp.bfloat16)

        # single (P, C) x (C, T) MXU matmul serves bg AND fg (shared grid protos;
        # last slot = global fg proto). SCALER is already folded into proto_ref.
        dists = jnp.dot(proto_ref[...], q_bf,
                        preferred_element_type=jnp.float32)        # (P, T)

        valid_bg = stats_ref[:, 0:1] > 0.5
        valid_fg = stats_ref[:, 1:2] > 0.5
        ranks_bg = stats_ref[:, 2:3]

        neg = jnp.float32(-1e30)
        big = jnp.float32(1e9)

        # --- background ('gridconv'): masked softmax-weighted sum -------------
        m_bg = jnp.where(valid_bg, dists, neg)
        mx_bg = jnp.max(m_bg, axis=0, keepdims=True)               # (1, T)
        ex_bg = jnp.exp(m_bg - mx_bg)                              # invalid -> exp(-huge) = 0
        inv_bg = pl.reciprocal(jnp.sum(ex_bg, axis=0, keepdims=True) + 1e-30,
                               approx=True)
        pred_bg = jnp.sum(ex_bg * dists, axis=0, keepdims=True) * inv_bg

        # background prototype-assignment map (compacted rank of argmax slot)
        assign_bg = jnp.min(jnp.where(m_bg >= mx_bg, ranks_bg, big),
                            axis=0, keepdims=True)

        out_ref[0:2, :] = jnp.concatenate([pred_bg, assign_bg], axis=0)

        use_grid = flag_ref[0] > 0

        @pl.when(use_grid)                      # fg 'gridconv+'
        def _():
            m_fg = jnp.where(valid_fg, dists, neg)
            mx_fg = jnp.max(m_fg, axis=0, keepdims=True)
            ex_fg = jnp.exp(m_fg - mx_fg)
            inv_fg = pl.reciprocal(jnp.sum(ex_fg, axis=0, keepdims=True) + 1e-30,
                                   approx=True)
            out_ref[2:3, :] = jnp.sum(ex_fg * dists, axis=0, keepdims=True) * inv_fg

        @pl.when(jnp.logical_not(use_grid))     # fg 'mask' mode == global-proto row
        def _():
            out_ref[2:3, :] = dists[pslots - 1:pslots, :]
    return kernel


def _query_stage(use_grid_flag, qry_T, protos, stats):
    cpad, hw_pad = qry_T.shape
    p = protos.shape[0]
    tile = _choose_query_tile(hw_pad)
    n_tiles = hw_pad // tile
    kernel = _make_query_kernel(p)
    cost = pl.CostEstimate(
        flops=int(2 * hw_pad * cpad * p + 8 * hw_pad * p),
        transcendentals=int(hw_pad * p + 2 * hw_pad),
        bytes_accessed=int(2 * hw_pad * cpad + 2 * p * cpad + 4 * p * 8 + 4 * 3 * hw_pad))
    grid_spec = pltpu.PrefetchScalarGridSpec(
        num_scalar_prefetch=1,
        grid=(n_tiles,),
        in_specs=[pl.BlockSpec((cpad, tile), lambda i, f: (0, i)),
                  pl.BlockSpec((p, cpad), lambda i, f: (0, 0)),
                  pl.BlockSpec((p, 8), lambda i, f: (0, 0))],
        out_specs=pl.BlockSpec((3, tile), lambda i, f: (0, i)))
    return pl.pallas_call(
        kernel,
        grid_spec=grid_spec,
        out_shape=jax.ShapeDtypeStruct((3, hw_pad), jnp.float32),
        compiler_params=pltpu.CompilerParams(
            dimension_semantics=("parallel",),
            vmem_limit_bytes=VMEM_LIMIT),
        cost_estimate=cost,
    )(use_grid_flag, qry_T, protos, stats)


# ----------------------------------------------------------------------------
# JAX glue: bilinear resize (align_corners=False) via small resize matrices
# ----------------------------------------------------------------------------
def _bilinear_matrix(in_size, out_size):
    m = np.zeros((out_size, in_size), dtype=np.float32)
    scale = in_size / out_size
    for i in range(out_size):
        src = (i + 0.5) * scale - 0.5
        src = max(src, 0.0)
        i0 = min(int(np.floor(src)), in_size - 1)
        i1 = min(i0 + 1, in_size - 1)
        w1 = src - i0
        m[i, i0] += 1.0 - w1
        m[i, i1] += w1
    return jnp.asarray(m)


def bilinear_resize_nchw(x, out_hw):
    h_out, w_out = int(out_hw[0]), int(out_hw[1])
    _, _, h, w = x.shape
    rh = _bilinear_matrix(h, h_out)
    rw = _bilinear_matrix(w, w_out)
    return jnp.einsum('oh,nchw,pw->ncop', rh, x.astype(jnp.float32), rw)


# ----------------------------------------------------------------------------
# FewShotSeg (ALPNet) wrapper
# ----------------------------------------------------------------------------
class FewShotSegPallas:
    def __init__(self, in_channels=3, pretrained_path=None, cfg=None):
        self.config = cfg or {'align': False}
        self.proto_grid = self.config['proto_grid_size']
        self.feature_hw = self.config['feature_hw']
        self.feat_dim = self.config.get('feat_dim', 32)
        self.patch = self.config.get('encoder_stride', 4)
        self.c_pad = _round_up(max(self.feat_dim, 1), 128)
        self.kin = in_channels * self.patch * self.patch
        self.kin_pad = _round_up(self.kin, 128)
        # TODO(synk): TVDeeplabRes101Encoder backbone replaced by a deterministic
        # synthetic patch-embed encoder (Pallas matmul); no checkpoint loading.
        key = jax.random.PRNGKey(0)
        k1, k2 = jax.random.split(key)
        w = jax.random.normal(k1, (self.kin, self.feat_dim), jnp.float32) / np.sqrt(self.kin)
        b = jax.random.normal(k2, (1, self.feat_dim), jnp.float32) * 0.01
        enc_w = jnp.zeros((self.kin_pad, self.c_pad), jnp.float32)
        enc_w = enc_w.at[:self.kin, :self.feat_dim].set(w)
        self.enc_w = enc_w.astype(jnp.bfloat16)        # padded channels are exactly 0
        self.enc_b = jnp.zeros((1, self.c_pad), jnp.float32).at[:, :self.feat_dim].set(b)

    # --- encoder -------------------------------------------------------------
    def encode(self, imgs):                            # imgs: (N, 3, H, W)
        n, c, h, w = imgs.shape
        p = self.patch
        hf, wf = h // p, w // p
        x = imgs[:, :, :hf * p, :wf * p].reshape(n, c, hf, p, wf, p)
        x = jnp.transpose(x, (0, 2, 4, 1, 3, 5)).reshape(n * hf * wf, c * p * p)
        if self.kin < self.kin_pad:
            x = jnp.pad(x, ((0, 0), (0, self.kin_pad - self.kin)))
        feats = patch_embed(x.astype(jnp.bfloat16), self.enc_w, self.enc_b)
        return feats.reshape(n, hf * wf, self.c_pad), (hf, wf)     # bf16 (N, HW, Cpad)

    # --- fused MultiProtoAsConv (bg 'gridconv' + fg 'gridconv+'/'mask') -------
    def classify_fused(self, qry_hwc, sup_hwc, bg_msk, fg_msk, fts_size,
                       isval=False, val_wsize=None):
        hf, wf = int(fts_size[0]), int(fts_size[1])
        hw = hf * wf

        if isval and val_wsize is not None:
            k = int(val_wsize)
        else:
            k = hf // self.proto_grid
        gh, gw = hf // k, wf // k
        ncells = gh * gw
        assert 0 < ncells < PSLOTS, "grid cells must fit into 128 prototype slots"

        # per-pixel cell ids (static; -1 = not inside any grid cell)
        yy, xx = np.meshgrid(np.arange(hf), np.arange(wf), indexing='ij')
        cy, cx = yy // k, xx // k
        cid = np.where((cy < gh) & (cx < gw), cy * gw + cx, -1).astype(np.int32)
        cell_ids = jnp.asarray(cid.reshape(1, hw))

        # fg masked-average weights for the global prototype (slot PSLOTS-1)
        fg_flat = fg_msk.reshape(1, hw).astype(jnp.float32)
        fgw = fg_flat / (jnp.sum(fg_flat) + 1e-5)

        # per-cell mask densities -> validity flags / compacted ranks (tiny, XLA)
        def cell_density(m):
            return m[:gh * k, :gw * k].reshape(gh, k, gw, k).mean(axis=(1, 3)).reshape(-1)

        bg_c = cell_density(bg_msk.astype(jnp.float32))
        fg_c = cell_density(fg_msk.astype(jnp.float32))
        valid_bg = jnp.zeros((PSLOTS,), jnp.float32).at[:ncells].set(
            (bg_c > BG_THRESH).astype(jnp.float32))
        valid_fg = jnp.zeros((PSLOTS,), jnp.float32).at[:ncells].set(
            (fg_c > FG_THRESH).astype(jnp.float32))
        valid_fg = valid_fg.at[PSLOTS - 1].set(1.0)
        ranks = jnp.cumsum(valid_bg) - 1.0
        stats = jnp.zeros((PSLOTS, 8), jnp.float32)
        stats = stats.at[:, 0].set(valid_bg).at[:, 1].set(valid_fg).at[:, 2].set(ranks)

        # device-side fg-mode decision (no host sync; gates a pl.when in-kernel)
        if FG_PROT_MODE == 'mask':
            use_grid = jnp.zeros((1,), jnp.int32)
        else:
            ph, pw = (hf // 4) * 4, (wf // 4) * 4
            if ph >= 4 and pw >= 4:
                pooled = fg_msk[:ph, :pw].reshape(ph // 4, 4, pw // 4, 4).mean(axis=(1, 3))
            else:
                pooled = fg_msk
            use_grid = (jnp.max(pooled) >= FG_THRESH).astype(jnp.int32).reshape(1)

        # stage 1: support -> 128 normalized, SCALER-folded prototypes (bf16)
        protos = _proto_stage(cell_ids, fgw, sup_hwc, k)

        # stage 2: lane-dense query tiles vs resident prototypes
        hw_pad = _round_up(hw, 128)
        qry_T = jnp.transpose(qry_hwc, (1, 0))                    # (Cpad, HW) bf16
        if hw_pad > hw:
            qry_T = jnp.pad(qry_T, ((0, 0), (0, hw_pad - hw)))
        out = _query_stage(use_grid, qry_T, protos, stats)[:, :hw]  # (3, HW)

        pred_bg = out[0].reshape(hf, wf)[None, None]   # (1, 1, Hf, Wf)
        assign = out[1].reshape(1, hf, wf)             # (1, Hf, Wf)
        pred_fg = out[2].reshape(hf, wf)[None, None]
        return pred_bg, pred_fg, assign

    # --- forward -------------------------------------------------------------
    def forward(self, supp_imgs, fore_mask, back_mask, qry_imgs,
                isval=False, val_wsize=None, show_viz=False):
        n_ways = len(supp_imgs)
        n_shots = len(supp_imgs[0])
        n_queries = len(qry_imgs)
        assert n_ways == 1 and n_queries == 1
        sup_bsize = supp_imgs[0][0].shape[0]
        img_size = supp_imgs[0][0].shape[-2:]
        qry_bsize = qry_imgs[0].shape[0]
        assert sup_bsize == qry_bsize == 1

        imgs_concat = jnp.concatenate(
            [jnp.concatenate(way, axis=0) for way in supp_imgs]
            + [jnp.concatenate(qry_imgs, axis=0)], axis=0)
        feats, fts_size = self.encode(imgs_concat)                 # (N, HW, Cpad) bf16
        n_sup = n_ways * n_shots * sup_bsize
        hw = fts_size[0] * fts_size[1]
        supp_fts = feats[:n_sup].reshape(n_ways, n_shots, sup_bsize, hw, self.c_pad)
        qry_fts = feats[n_sup:].reshape(n_queries, qry_bsize, hw, self.c_pad)

        fore_mask_t = jnp.stack([jnp.stack(way, axis=0) for way in fore_mask], axis=0)
        back_mask_t = jnp.stack([jnp.stack(way, axis=0) for way in back_mask], axis=0)

        # TODO(synk): place_seed_points_d (superpixel seed placement) has no clean
        # Pallas equivalent; its output is not consumed by the prototype classifier.
        _s_init_seed = jnp.zeros((1, 5, 2), jnp.int32)

        res_fg_msk = jnp.stack([bilinear_resize_nchw(fore_mask_t[w], fts_size)
                                for w in range(n_ways)], axis=0)   # (way, shot, B, Hf, Wf)
        res_bg_msk = jnp.stack([bilinear_resize_nchw(back_mask_t[w], fts_size)
                                for w in range(n_ways)], axis=0)

        bg_m = res_bg_msk[0, 0, 0]                                 # (Hf, Wf)
        fg_m = res_fg_msk[0, 0, 0]

        # single fused Pallas pipeline for bg ('gridconv') + fg ('gridconv+'/'mask')
        pred_bg, pred_fg, bg_assign = self.classify_fused(
            qry_fts[0, 0], supp_fts[0, 0, 0], bg_m, fg_m, fts_size,
            isval=isval, val_wsize=val_wsize)

        scores = [pred_bg, pred_fg]
        assign_maps = [bg_assign]

        pred = jnp.concatenate(scores, axis=1)          # (1, 1+ways, Hf, Wf)
        out = bilinear_resize_nchw(pred, img_size)      # (1, 1+ways, H, W)
        outputs = [out]

        # TODO(synk): alignLoss branch skipped (config['align'] is False / eval mode).
        align_loss = jnp.float32(0.0)

        output = jnp.stack(outputs, axis=1)
        output = output.reshape(-1, *output.shape[2:])
        assign_maps = jnp.stack(assign_maps, axis=1)
        bg_sim_maps = None
        fg_sim_maps = None
        return output, align_loss / sup_bsize, [bg_sim_maps, fg_sim_maps], assign_maps


# ----------------------------------------------------------------------------
# pure-JAX reference of the fused classifier (for a loose correctness check)
# ----------------------------------------------------------------------------
def _reference_classifier(qry_hwc, sup_hwc, bg_m, fg_m, hf, wf, k, use_grid):
    sup = sup_hwc.astype(jnp.float32)
    qry = qry_hwc.astype(jnp.float32)
    c = sup.shape[-1]
    gh, gw = hf // k, wf // k
    cells = sup.reshape(hf, wf, c)[:gh * k, :gw * k].reshape(gh, k, gw, k, c)
    cells = cells.mean(axis=(1, 3)).reshape(gh * gw, c)
    bg_c = bg_m[:gh * k, :gw * k].reshape(gh, k, gw, k).mean(axis=(1, 3)).reshape(-1)
    fg_c = fg_m[:gh * k, :gw * k].reshape(gh, k, gw, k).mean(axis=(1, 3)).reshape(-1)
    fg_flat = fg_m.reshape(-1).astype(jnp.float32)
    glb = (fg_flat[:, None] * sup).sum(0) / (fg_flat.sum() + 1e-5)

    def safe_norm(x):
        n = jnp.sqrt(jnp.sum(x * x, axis=-1, keepdims=True))
        return x / jnp.maximum(n, 1e-4)

    qn = safe_norm(qry)

    def masked_softmax_pred(d, sel):
        dm = jnp.where(sel[None, :], d, -jnp.inf)
        w = jax.nn.softmax(dm, axis=1)
        return jnp.sum(w * jnp.where(sel[None, :], d, 0.0), axis=1)

    sel_bg = bg_c > BG_THRESH
    d_bg = qn @ safe_norm(cells).T * SCALER
    pred_bg = masked_softmax_pred(d_bg, sel_bg)

    pro_fg = safe_norm(jnp.concatenate([cells, glb[None, :]], axis=0))
    d_fg = qn @ pro_fg.T * SCALER
    sel_fg = jnp.concatenate([fg_c > FG_THRESH, jnp.ones((1,), bool)], axis=0)
    if use_grid:
        pred_fg = masked_softmax_pred(d_fg, sel_fg)
    else:
        pred_fg = d_fg[:, -1]
    return pred_bg.reshape(hf, wf), pred_fg.reshape(hf, wf)


# ----------------------------------------------------------------------------
if __name__ == "__main__":
    H = W = 32
    cfg = {'align': False, 'which_model': 'dlfcn_res101', 'use_coco_init': False,
           'cls_name': 'grid_proto', 'proto_grid_size': 2, 'feature_hw': [8, 8],
           'feat_dim': 32, 'encoder_stride': 4}
    model = FewShotSegPallas(in_channels=3, cfg=cfg)

    key = jax.random.PRNGKey(0)
    k1, k2 = jax.random.split(key)
    supp_img = jax.random.normal(k1, (1, 3, H, W), jnp.float32)
    qry_img = jax.random.normal(k2, (1, 3, H, W), jnp.float32)

    # deterministic foreground mask: top-left quadrant
    yy, xx = jnp.meshgrid(jnp.arange(H), jnp.arange(W), indexing='ij')
    fg = ((yy < 16) & (xx < 16)).astype(jnp.float32)[None]     # (1, H, W)
    bg = 1.0 - fg

    supp_imgs = [[supp_img]]
    fore_mask = [[fg]]
    back_mask = [[bg]]
    qry_imgs = [qry_img]

    output, align_loss, sim_maps, assign_maps = model.forward(
        supp_imgs, fore_mask, back_mask, qry_imgs,
        isval=False, val_wsize=None, show_viz=False)

    output = jax.block_until_ready(output)
    assign_maps = jax.block_until_ready(assign_maps)

    assert output.shape == (1, 2, H, W)
    assert assign_maps.shape == (1, 1, 8, 8)
    assert bool(jnp.all(jnp.isfinite(output)))
    assert bool(jnp.all(jnp.isfinite(assign_maps)))

    # loose pure-JAX reference check (same bf16 features, f32 math everywhere)
    feats, fts_size = model.encode(jnp.concatenate([supp_img, qry_img], axis=0))
    hf, wf = fts_size
    sup_hwc, qry_hwc = feats[0], feats[1]
    fg_m = bilinear_resize_nchw(fg[None], fts_size)[0, 0]
    bg_m = bilinear_resize_nchw(bg[None], fts_size)[0, 0]
    kk = hf // cfg['proto_grid_size']
    ph, pw = (hf // 4) * 4, (wf // 4) * 4
    pooled = fg_m[:ph, :pw].reshape(ph // 4, 4, pw // 4, 4).mean(axis=(1, 3))
    use_grid = bool(jnp.max(pooled) >= FG_THRESH) and FG_PROT_MODE != 'mask'
    ref_bg, ref_fg = _reference_classifier(qry_hwc, sup_hwc, bg_m, fg_m, hf, wf, kk, use_grid)
    ref_out = bilinear_resize_nchw(jnp.stack([ref_bg, ref_fg], axis=0)[None], (H, W))
    max_err = float(jnp.max(jnp.abs(ref_out - output)))
    assert max_err < 1.0, f"prediction mismatch vs reference: {max_err}"

    print("KERNEL_OK")
</pallas_src>

<mosaic_0001>
module attributes {stable_mosaic.version = 11 : i64} {
  func.func @_patch_embed_kernel(%arg0: i32, %arg1: memref<128x128xbf16, #tpu.memory_space<vmem>>, %arg2: memref<128x128xbf16, #tpu.memory_space<vmem>>, %arg3: memref<1x128xf32, #tpu.memory_space<vmem>>, %arg4: memref<128x128xbf16, #tpu.memory_space<vmem>>) attributes {dimension_semantics = [#tpu.dimension_semantics<parallel>], iteration_bounds = array<i64: 1>, scalar_prefetch = 0 : i64, scratch_operands = 0 : i64, tpu.core_type = #tpu.core_type<tc>, window_params = [{transform_indices = @transform_0, window_bounds = array<i64: 128, 128>}, {pipeline_mode = #tpu.pipeline_mode<synchronous>, transform_indices = @transform_1, window_bounds = array<i64: 128, 128>}, {pipeline_mode = #tpu.pipeline_mode<synchronous>, transform_indices = @transform_2, window_bounds = array<i64: 1, 128>}, {transform_indices = @transform_3, window_bounds = array<i64: 128, 128>}]} {
    %c0 = arith.constant 0 : index
    %c0_0 = arith.constant 0 : index
    %0 = vector.load %arg1[%c0, %c0_0] : memref<128x128xbf16, #tpu.memory_space<vmem>>, vector<128x128xbf16>
    %c0_1 = arith.constant 0 : index
    %c0_2 = arith.constant 0 : index
    %1 = vector.load %arg2[%c0_1, %c0_2] : memref<128x128xbf16, #tpu.memory_space<vmem>>, vector<128x128xbf16>
    %cst = arith.constant dense<0.000000e+00> : vector<128x128xf32>
    %2 = tpu.matmul %0, %1, %cst {dimension_numbers = #tpu.dot_dimension_numbers<[1], [0], [0], [1], [0, 0, 1, 1], [], []>} : vector<128x128xbf16>, vector<128x128xbf16>, vector<128x128xf32> -> vector<128x128xf32>
    %c0_3 = arith.constant 0 : index
    %c0_4 = arith.constant 0 : index
    %3 = vector.load %arg3[%c0_3, %c0_4] : memref<1x128xf32, #tpu.memory_space<vmem>>, vector<1x128xf32>
    %4 = vector.broadcast %3 : vector<1x128xf32> to vector<128x128xf32>
    %5 = arith.addf %2, %4 : vector<128x128xf32>
    %cst_5 = arith.constant 0.000000e+00 : f32
    %6 = vector.broadcast %cst_5 : f32 to vector<128x128xf32>
    %7 = arith.maximumf %5, %6 : vector<128x128xf32>
    %8 = arith.truncf %7 : vector<128x128xf32> to vector<128x128xbf16>
    %c0_6 = arith.constant 0 : index
    %c0_7 = arith.constant 0 : index
    %9 = vector.load %arg4[%c0_6, %c0_7] : memref<128x128xbf16, #tpu.memory_space<vmem>>, vector<128x128xbf16>
    tpu.vector_store %arg4[%c0_6, %c0_7], %8 {strides = array<i32>} : memref<128x128xbf16, #tpu.memory_space<vmem>>, vector<128x128xbf16>,
    return
  }
  func.func @transform_0(%arg0: i32) -> (i32, i32) {
    %c0_i32 = arith.constant 0 : i32
    %c0_i32_0 = arith.constant 0 : i32
    return %arg0, %c0_i32 : i32, i32
  }
  func.func @transform_1(%arg0: i32) -> (i32, i32) {
    %c0_i32 = arith.constant 0 : i32
    %c0_i32_0 = arith.constant 0 : i32
    %c0_i32_1 = arith.constant 0 : i32
    return %c0_i32, %c0_i32_0 : i32, i32
  }
  func.func @transform_2(%arg0: i32) -> (i32, i32) {
    %c0_i32 = arith.constant 0 : i32
    %c0_i32_0 = arith.constant 0 : i32
    %c0_i32_1 = arith.constant 0 : i32
    return %c0_i32, %c0_i32_0 : i32, i32
  }
  func.func @transform_3(%arg0: i32) -> (i32, i32) {
    %c0_i32 = arith.constant 0 : i32
    %c0_i32_0 = arith.constant 0 : i32
    return %arg0, %c0_i32 : i32, i32
  }
}

</mosaic_0001>

<llo_original>
// kernel: tpu_custom_call.1
$region0: #{tpu_custom_call.1}
  #allocation0 [shape = 'u32[]', space=smem, size = 0x4, offset = 0x4, fixed_abs, tag = 'smem constant byte address 0x4 - core index']
  #allocation1 [shape = 'u32[144,128]{1,0:T(1,128)}', space=vmem, size = 0x12000, scoped, tag = 'internal scratch']
  %s0 = inlined_call_operand.hbm [shape: bf16[128,128], index: 0, kind: input, shape index: {}]
  %s1 = inlined_call_operand.hbm [shape: bf16[128,128], index: 1, kind: input, shape index: {}]
  %s2 = inlined_call_operand.vmem [shape: f32[1,128], index: 2, kind: input, shape index: {}]
  %s3 = inlined_call_operand.hbm [shape: bf16[128,128], index: 3, kind: output, shape index: {}]
  %s4 = sld [smem:[#allocation0]]
  $region30: #{tpu_custom_call.1} parent=0
    _
  %s6 = ssub.s32 1, %s4
  %s7 = scalar_select 0, %s6, %s4
  $region1: #{tpu_custom_call.1} parent=0
    #allocation2 [shape = 'u8[32768]{0}', space=vmem, size = 0x8000, scoped, tag = 'input window, operand 0, single buffered']
    #allocation3 [shape = 's32[1]{0}', space=sflag, size = 0x4, scoped, tag = 'scoped memory for tpu_custom_call.1']
    #allocation4 [shape = 's32[1]{0}', space=sflag, size = 0x4, scoped, tag = 'scoped memory for tpu_custom_call.1']
    #allocation5 [shape = 'u8[32768]{0}', space=vmem, size = 0x8000, scoped, tag = 'input window, operand 1, single buffered']
    #allocation6 [shape = 's32[1]{0}', space=sflag, size = 0x4, scoped, tag = 'scoped memory for tpu_custom_call.1']
    #allocation7 [shape = 'u8[32768]{0}', space=vmem, size = 0x8000, scoped, tag = 'output window, operand 0, single buffered']
    %8 = vsyncpa [#allocation3], 0
    %9 = vsyncpa [#allocation6], 0
    %10 = vsyncpa [#allocation4], 0
    // Predicated region
    $region2: #{tpu_custom_call.1} parent=1 // pred_check
      _
    $region3: #{tpu_custom_call.1} parent=1 // pred_check_branch
      %12 = sbr.rel (0) target = $region5
    $region4: #{tpu_custom_call.1} parent=1 // pred_region
      %s14 = ssub.s32 1024, 1024
      %15 = vsyncadd [#allocation3], %s14
      %s16 = sshll.u32 [#allocation2], 4
      %s17 = int_to_ptr.vmem [resolvable:$true] %s16
      %22 = dma.hbm_to_vmem [thread:$0]  %s0, 1024, %s17, [#allocation3], 64, 64, 4
    $region5: #{tpu_custom_call.1} parent=1 // pred_fallthru
      _
    // Predicated region
    $region6: #{tpu_custom_call.1} parent=1 // pred_check
      _
    $region7: #{tpu_custom_call.1} parent=1 // pred_check_branch
      %24 = sbr.rel (0) target = $region9
    $region8: #{tpu_custom_call.1} parent=1 // pred_region
      %s26 = ssub.s32 1024, 1024
      %27 = vsyncadd [#allocation6], %s26
      %s28 = sshll.u32 [#allocation5], 4
      %s29 = int_to_ptr.vmem [resolvable:$true] %s28
      %34 = dma.hbm_to_vmem [thread:$0]  %s1, 1024, %s29, [#allocation6], 64, 64, 4
    $region9: #{tpu_custom_call.1} parent=1 // pred_fallthru
      _
    // Predicated region
    $region10: #{tpu_custom_call.1} parent=1 // pred_check
      _
    $region11: #{tpu_custom_call.1} parent=1 // pred_check_branch
      %36 = sbr.rel (0) target = $region13
    $region12: #{tpu_custom_call.1} parent=1 // pred_region
      _
    $region13: #{tpu_custom_call.1} parent=1 // pred_fallthru
      _
    // Predicated region
    $region14: #{tpu_custom_call.1} parent=1 // pred_check
      _
    $region15: #{tpu_custom_call.1} parent=1 // pred_check_branch
      %38 = sbr.rel (0) target = $region17
    $region16: #{tpu_custom_call.1} parent=1 // pred_region
      %39 = dma.done [#allocation3], 1024
    $region17: #{tpu_custom_call.1} parent=1 // pred_fallthru
      _
    // Predicated region
    $region18: #{tpu_custom_call.1} parent=1 // pred_check
      _
    $region19: #{tpu_custom_call.1} parent=1 // pred_check_branch
      %41 = sbr.rel (0) target = $region21
    $region20: #{tpu_custom_call.1} parent=1 // pred_region
      %42 = dma.done [#allocation6], 1024
    $region21: #{tpu_custom_call.1} parent=1 // pred_fallthru
      _
    %v44 = vld [vmem:[#allocation2] sm:$0xf]
    %v45 = vld [vmem:[#allocation2 + $0x4] sm:$0xf]
    %v46 = vld [vmem:[#allocation2 + $0x8] sm:$0xf]
    %v47 = vld [vmem:[#allocation2 + $0xc] sm:$0xf]
    %v48 = vld [vmem:[#allocation2 + $0x10] sm:$0xf]
    %v49 = vld [vmem:[#allocation2 + $0x14] sm:$0xf]
    %v50 = vld [vmem:[#allocation2 + $0x18] sm:$0xf]
    %v51 = vld [vmem:[#allocation2 + $0x1c] sm:$0xf]
    %v52 = vld [vmem:[#allocation2 + $0x20] sm:$0xf]
    %v53 = vld [vmem:[#allocation2 + $0x24] sm:$0xf]
    %v54 = vld [vmem:[#allocation2 + $0x28] sm:$0xf]
    %v55 = vld [vmem:[#allocation2 + $0x2c] sm:$0xf]
    %v56 = vld [vmem:[#allocation2 + $0x30] sm:$0xf]
    %v57 = vld [vmem:[#allocation2 + $0x34] sm:$0xf]
    %v58 = vld [vmem:[#allocation2 + $0x38] sm:$0xf]
    %v59 = vld [vmem:[#allocation2 + $0x3c] sm:$0xf]
    %v60 = vld [vmem:[#allocation5] sm:$0xf]
    %v61 = vld [vmem:[#allocation5 + $0x4] sm:$0xf]
    %v62 = vld [vmem:[#allocation5 + $0x8] sm:$0xf]
    %v63 = vld [vmem:[#allocation5 + $0xc] sm:$0xf]
    %v64 = vld [vmem:[#allocation5 + $0x10] sm:$0xf]
    %v65 = vld [vmem:[#allocation5 + $0x14] sm:$0xf]
    %v66 = vld [vmem:[#allocation5 + $0x18] sm:$0xf]
    %v67 = vld [vmem:[#allocation5 + $0x1c] sm:$0xf]
    %v68 = vld [vmem:[#allocation5 + $0x20] sm:$0xf]
    %v69 = vld [vmem:[#allocation5 + $0x24] sm:$0xf]
    %v70 = vld [vmem:[#allocation5 + $0x28] sm:$0xf]
    %v71 = vld [vmem:[#allocation5 + $0x2c] sm:$0xf]
    %v72 = vld [vmem:[#allocation5 + $0x30] sm:$0xf]
    %v73 = vld [vmem:[#allocation5 + $0x34] sm:$0xf]
    %v74 = vld [vmem:[#allocation5 + $0x38] sm:$0xf]
    %v75 = vld [vmem:[#allocation5 + $0x3c] sm:$0xf]
    %v76 = vld [vmem:[%s2] sm:$0x1]
    %v78 = vlaneseq
    %v79 = vshrl.u32 %v78, 7
    %v80 = vsub.s32 0, %v79
    %v81 = vrot.slane %v76, %v80
    %v99 = vunpack.c.l.b16 %v44
    %v100 = vunpack.c.l.b16 %v45
    %v101 = vunpack.c.l.b16 %v46
    %v102 = vunpack.c.l.b16 %v47
    %v103 = vunpack.c.l.b16 %v48
    %v104 = vunpack.c.l.b16 %v49
    %v105 = vunpack.c.l.b16 %v50
    %v106 = vunpack.c.l.b16 %v51
    %v107 = vunpack.c.l.b16 %v52
    %v108 = vunpack.c.l.b16 %v53
    %v109 = vunpack.c.l.b16 %v54
    %v110 = vunpack.c.l.b16 %v55
    %v111 = vunpack.c.l.b16 %v56
    %v112 = vunpack.c.l.b16 %v57
    %v113 = vunpack.c.l.b16 %v58
    %v114 = vunpack.c.l.b16 %v59
    %v115 = vpack.c.b16 %v100, %v99
    %v116 = vpack.c.b16 %v102, %v101
    %v117 = vpack.c.b16 %v104, %v103
    %v118 = vpack.c.b16 %v106, %v105
    %v119 = vpack.c.b16 %v108, %v107
    %v120 = vpack.c.b16 %v110, %v109
    %v121 = vpack.c.b16 %v112, %v111
    %v122 = vpack.c.b16 %v114, %v113
    %v147 = vunpack.c.l.b16 %v60
    %v148 = vunpack.c.l.b16 %v61
    %v149 = vunpack.c.l.b16 %v62
    %v150 = vunpack.c.l.b16 %v63
    %v151 = vunpack.c.l.b16 %v64
    %v152 = vunpack.c.l.b16 %v65
    %v153 = vunpack.c.l.b16 %v66
    %v154 = vunpack.c.l.b16 %v67
    %v155 = vunpack.c.l.b16 %v68
    %v156 = vunpack.c.l.b16 %v69
    %v157 = vunpack.c.l.b16 %v70
    %v158 = vunpack.c.l.b16 %v71
    %v159 = vunpack.c.l.b16 %v72
    %v160 = vunpack.c.l.b16 %v73
    %v161 = vunpack.c.l.b16 %v74
    %v162 = vunpack.c.l.b16 %v75
    %v163 = vpack.c.b16 %v148, %v147
    %v164 = vpack.c.b16 %v150, %v149
    %v165 = vpack.c.b16 %v152, %v151
    %v166 = vpack.c.b16 %v154, %v153
    %v167 = vpack.c.b16 %v156, %v155
    %v168 = vpack.c.b16 %v158, %v157
    %v169 = vpack.c.b16 %v160, %v159
    %v170 = vpack.c.b16 %v162, %v161
    %179 = vmatprep.subr.bf16.mxu0 0
    %180 = vmatpush1.bf16.msra.mxu0 %v170
    %181 = vmatprep.subr.bf16.mxu0 0
    %182 = vmatpush1.bf16.msra.mxu0 %v169
    %183 = vmatprep.subr.bf16.mxu0 0
    %184 = vmatpush1.bf16.msra.mxu0 %v168
    %185 = vmatprep.subr.bf16.mxu0 0
    %186 = vmatpush1.bf16.msra.mxu0 %v167
    %187 = vmatprep.subr.bf16.mxu0 0
    %188 = vmatpush1.bf16.msra.mxu0 %v166
    %189 = vmatprep.subr.bf16.mxu0 0
    %190 = vmatpush1.bf16.msra.mxu0 %v165
    %191 = vmatprep.subr.bf16.mxu0 0
    %192 = vmatpush1.bf16.msra.mxu0 %v164
    %193 = vmatprep.subr.bf16.mxu0 0
    %194 = vmatpush1.bf16.msra.mxu0 %v163
    %195 = vmatprep.subr.bf16.mxu0 0
    %196 = vmatpush2.bf16.msra.mxu0 0
    %197 = vmatprep.subr.bf16.mxu0 0
    %198 = vmatpush2.bf16.msra.mxu0 0
    %199 = vmatprep.subr.bf16.mxu0 0
    %200 = vmatpush2.bf16.msra.mxu0 0
    %201 = vmatprep.subr.bf16.mxu0 0
    %202 = vmatpush2.bf16.msra.mxu0 0
    %203 = vmatprep.subr.bf16.mxu0 0
    %204 = vmatpush2.bf16.msra.mxu0 0
    %205 = vmatprep.subr.bf16.mxu0 0
    %206 = vmatpush2.bf16.msra.mxu0 0
    %207 = vmatprep.subr.bf16.mxu0 0
    %208 = vmatpush2.bf16.msra.mxu0 0
    %209 = vmatprep.subr.bf16.mxu0 0
    %210 = vmatpush2.bf16.msra.mxu0 0
    %211 = vmatprep.mubr.bf16.mxu0 0
    %212 = vmatmul.mubr.bf16.gmra.mxu0 %v115
    %v213 = vpop.f32.mrf.mxu0
    %v214 = vadd.f32 %v81, %v213
    %v215 = vpop.f32.mrf.mxu0
    %v216 = vpop.f32.mrf.mxu0
    %v217 = vadd.f32 %v81, %v216
    %v218 = vpop.f32.mrf.mxu0
    %219 = vmatprep.mubr.bf16.mxu0 0
    %220 = vmatmul.mubr.bf16.gmra.mxu0 %v116
    %v221 = vpop.f32.mrf.mxu0
    %v222 = vadd.f32 %v81, %v221
    %v223 = vpop.f32.mrf.mxu0
    %v224 = vpop.f32.mrf.mxu0
    %v225 = vadd.f32 %v81, %v224
    %v226 = vpop.f32.mrf.mxu0
    %227 = vmatprep.mubr.bf16.mxu0 0
    %228 = vmatmul.mubr.bf16.gmra.mxu0 %v117
    %v229 = vpop.f32.mrf.mxu0
    %v230 = vadd.f32 %v81, %v229
    %v231 = vpop.f32.mrf.mxu0
    %v232 = vpop.f32.mrf.mxu0
    %v233 = vadd.f32 %v81, %v232
    %v234 = vpop.f32.mrf.mxu0
    %235 = vmatprep.mubr.bf16.mxu0 0
    %236 = vmatmul.mubr.bf16.gmra.mxu0 %v118
    %v237 = vpop.f32.mrf.mxu0
    %v238 = vadd.f32 %v81, %v237
    %v239 = vpop.f32.mrf.mxu0
    %v240 = vpop.f32.mrf.mxu0
    %v241 = vadd.f32 %v81, %v240
    %v242 = vpop.f32.mrf.mxu0
    %243 = vmatprep.mubr.bf16.mxu0 0
    %244 = vmatmul.mubr.bf16.gmra.mxu0 %v119
    %v245 = vpop.f32.mrf.mxu0
    %v246 = vadd.f32 %v81, %v245
    %v247 = vpop.f32.mrf.mxu0
    %v248 = vpop.f32.mrf.mxu0
    %v249 = vadd.f32 %v81, %v248
    %v250 = vpop.f32.mrf.mxu0
    %251 = vmatprep.mubr.bf16.mxu0 0
    %252 = vmatmul.mubr.bf16.gmra.mxu0 %v120
    %v253 = vpop.f32.mrf.mxu0
    %v254 = vadd.f32 %v81, %v253
    %v255 = vpop.f32.mrf.mxu0
    %v256 = vpop.f32.mrf.mxu0
    %v257 = vadd.f32 %v81, %v256
    %v258 = vpop.f32.mrf.mxu0
    %259 = vmatprep.mubr.bf16.mxu0 0
    %260 = vmatmul.mubr.bf16.gmra.mxu0 %v121
    %v261 = vpop.f32.mrf.mxu0
    %v262 = vadd.f32 %v81, %v261
    %v263 = vpop.f32.mrf.mxu0
    %v264 = vpop.f32.mrf.mxu0
    %v265 = vadd.f32 %v81, %v264
    %v266 = vpop.f32.mrf.mxu0
    %267 = vmatprep.mubr.bf16.mxu0 0
    %268 = vmatmul.mubr.bf16.gmra.mxu0 %v122
    %v269 = vpop.f32.mrf.mxu0
    %v270 = vadd.f32 %v81, %v269
    %v271 = vpop.f32.mrf.mxu0
    %v272 = vpop.f32.mrf.mxu0
    %v273 = vadd.f32 %v81, %v272
    %v274 = vpop.f32.mrf.mxu0
    %275 = vdwg.mxu0
    %v276 = vmax.f32 %v214, 0.0
    %v277 = vmax.f32 %v217, 0.0
    %v278 = vmax.f32 %v222, 0.0
    %v279 = vmax.f32 %v225, 0.0
    %v280 = vmax.f32 %v230, 0.0
    %v281 = vmax.f32 %v233, 0.0
    %v282 = vmax.f32 %v238, 0.0
    %v283 = vmax.f32 %v241, 0.0
    %v284 = vmax.f32 %v246, 0.0
    %v285 = vmax.f32 %v249, 0.0
    %v286 = vmax.f32 %v254, 0.0
    %v287 = vmax.f32 %v257, 0.0
    %v288 = vmax.f32 %v262, 0.0
    %v289 = vmax.f32 %v265, 0.0
    %v290 = vmax.f32 %v270, 0.0
    %v291 = vmax.f32 %v273, 0.0
    %v292 = vpack.c.bf16 %v277, %v276
    %v293 = vpack.c.bf16 %v279, %v278
    %v294 = vpack.c.bf16 %v281, %v280
    %v295 = vpack.c.bf16 %v283, %v282
    %v296 = vpack.c.bf16 %v285, %v284
    %v297 = vpack.c.bf16 %v287, %v286
    %v298 = vpack.c.bf16 %v289, %v288
    %v299 = vpack.c.bf16 %v291, %v290
    %v308 = vunpack.c.l.b16 %v292
    %v309 = vunpack.c.h.b16 %v292
    %v310 = vunpack.c.l.b16 %v293
    %v311 = vunpack.c.h.b16 %v293
    %v312 = vunpack.c.l.b16 %v294
    %v313 = vunpack.c.h.b16 %v294
    %v314 = vunpack.c.l.b16 %v295
    %v315 = vunpack.c.h.b16 %v295
    %v316 = vunpack.c.l.b16 %v296
    %v317 = vunpack.c.h.b16 %v296
    %v318 = vunpack.c.l.b16 %v297
    %v319 = vunpack.c.h.b16 %v297
    %v320 = vunpack.c.l.b16 %v298
    %v321 = vunpack.c.h.b16 %v298
    %v322 = vunpack.c.l.b16 %v299
    %v323 = vunpack.c.h.b16 %v299
    %v324 = vpack.c.b16 %v308, %v308
    %v325 = vpack.c.b16 %v309, %v309
    %v326 = vpack.c.b16 %v310, %v310
    %v327 = vpack.c.b16 %v311, %v311
    %v328 = vpack.c.b16 %v312, %v312
    %v329 = vpack.c.b16 %v313, %v313
    %v330 = vpack.c.b16 %v314, %v314
    %v331 = vpack.c.b16 %v315, %v315
    %v332 = vpack.c.b16 %v316, %v316
    %v333 = vpack.c.b16 %v317, %v317
    %v334 = vpack.c.b16 %v318, %v318
    %v335 = vpack.c.b16 %v319, %v319
    %v336 = vpack.c.b16 %v320, %v320
    %v337 = vpack.c.b16 %v321, %v321
    %v338 = vpack.c.b16 %v322, %v322
    %v339 = vpack.c.b16 %v323, %v323
    %356 = vst [vmem:[#allocation7] sm:$0xf] %v324
    %357 = vst [vmem:[#allocation7 + $0x4] sm:$0xf] %v325
    %358 = vst [vmem:[#allocation7 + $0x8] sm:$0xf] %v326
    %359 = vst [vmem:[#allocation7 + $0xc] sm:$0xf] %v327
    %360 = vst [vmem:[#allocation7 + $0x10] sm:$0xf] %v328
    %361 = vst [vmem:[#allocation7 + $0x14] sm:$0xf] %v329
    %362 = vst [vmem:[#allocation7 + $0x18] sm:$0xf] %v330
    %363 = vst [vmem:[#allocation7 + $0x1c] sm:$0xf] %v331
    %364 = vst [vmem:[#allocation7 + $0x20] sm:$0xf] %v332
    %365 = vst [vmem:[#allocation7 + $0x24] sm:$0xf] %v333
    %366 = vst [vmem:[#allocation7 + $0x28] sm:$0xf] %v334
    %367 = vst [vmem:[#allocation7 + $0x2c] sm:$0xf] %v335
    %368 = vst [vmem:[#allocation7 + $0x30] sm:$0xf] %v336
    %369 = vst [vmem:[#allocation7 + $0x34] sm:$0xf] %v337
    %370 = vst [vmem:[#allocation7 + $0x38] sm:$0xf] %v338
    %371 = vst [vmem:[#allocation7 + $0x3c] sm:$0xf] %v339
    // Predicated region
    $region22: #{tpu_custom_call.1} parent=1 // pred_check
      _
    $region23: #{tpu_custom_call.1} parent=1 // pred_check_branch
      %373 = sbr.rel (0) target = $region25
    $region24: #{tpu_custom_call.1} parent=1 // pred_region
      %s375 = ssub.s32 1024, 1024
      %376 = vsyncadd [#allocation4], %s375
      %s377 = sshll.u32 [#allocation7], 4
      %s378 = int_to_ptr.vmem [resolvable:$true] %s377
      %383 = dma.vmem_to_hbm [thread:$0]  %s378, 1024, %s3, [#allocation4], 64, 64, 4
    $region25: #{tpu_custom_call.1} parent=1 // pred_fallthru
      _
    // Predicated region
    $region26: #{tpu_custom_call.1} parent=1 // pred_check
      _
    $region27: #{tpu_custom_call.1} parent=1 // pred_check_branch
      %385 = sbr.rel (0) target = $region29
    $region28: #{tpu_custom_call.1} parent=1 // pred_region
      %386 = dma.done [#allocation4], 1024
    $region29: #{tpu_custom_call.1} parent=1 // pred_fallthru
      _
    %387 = vsyncpa [#allocation3], 1
    %388 = vsyncpa [#allocation6], 1
    %389 = vsyncpa [#allocation4], 1

</llo_original>
